<compile_context>
chip_gen: v7x
topology: tpu7x:2x2x1
jax: 0.10.0
libtpu: 0.0.40
codegen_flags: <defaults>
</compile_context>

<pallas_src>
import jax
import jax.numpy as jnp
from jax.experimental import pallas as pl
from jax.experimental.pallas import tpu as pltpu

_LANE = 128
_SUBLANE = 8


def _round_up(x, m):
    return (x + m - 1) // m * m


# ----------------------------------------------------------------------------
# Emission-matrix construction (plain JAX glue, runs once per recurrent_init).
# ----------------------------------------------------------------------------
def make_emission_matrix_from_kernels(em, ins, length):
    """Mirror of ProfileHMMEmitter.make_emission_matrix_from_kernels."""
    s = em.shape[-1]
    i1 = ins[None, :]                                    # (1, s)
    i2 = jnp.stack([ins] * (length + 1), axis=0)         # (length+1, s)
    emissions = jnp.concatenate([i1, em, i2], axis=0)    # (2*length+2, s)
    emissions = jax.nn.softmax(emissions, axis=-1)
    emissions = jnp.concatenate(
        [emissions, jnp.zeros_like(emissions[:, :1])], axis=-1)       # (.., s+1)
    end_state_emission = jax.nn.one_hot(
        jnp.array([s]), s + 1, dtype=em.dtype)                        # (1, s+1)
    emissions = jnp.concatenate([emissions, end_state_emission], axis=0)
    return emissions                                      # (2*length+3, s+1)


def make_B(emission_kernels, insertion_kernels, lengths):
    """Mirror of ProfileHMMEmitter.make_B (padding rule taken verbatim).

    NOTE: the original module uses max_num_states = len(lengths) + 2, which
    only matches the true state count 2*length+3 for specific configurations
    (like the demo below, where padding == 0).  We mirror it literally to
    keep semantics identical to the PyTorch spec.
    """
    num_models = len(lengths)
    max_num_states = max([len(lengths) + 2] * num_models)
    mats = []
    for i in range(num_models):
        em_mat = make_emission_matrix_from_kernels(
            emission_kernels[i], insertion_kernels[i], lengths[i])
        padding = max_num_states - em_mat.shape[0]
        em_mat_pad = jnp.pad(em_mat, ((0, padding), (0, 0)))
        mats.append(em_mat_pad)
    return jnp.stack(mats, axis=0)                        # (k, q, s+1)


def prepare_B_for_forward(B, s_in):
    """recurrent_init-time prep: slice to the input alphabet once so the
    forward hot path does no per-call slice/copy of B.  B stays f32 to match
    the module's f32 matmul semantics."""
    return B[..., :s_in]                                   # (k, q, s_in)


# ----------------------------------------------------------------------------
# Pallas kernel.
# ----------------------------------------------------------------------------
def _emit_kernel(b_ref, x_ref, o_ref):
    # b_ref: (k, q, s_in)   f32 emission matrices (tiny, VMEM-resident)
    # x_ref: (k, TB, s_in)  f32 one batch tile of the flattened inputs
    # o_ref: (k, TB, q)     f32 emission scores in the module's layout
    #                       (no wrapper-side transpose pass needed).
    o_ref[...] = jnp.einsum(
        "kbs,kqs->kbq", x_ref[...], b_ref[...],
        preferred_element_type=jnp.float32,
    ).astype(o_ref.dtype)


def _choose_b_tile(k, s_in, q, b_flat, x_itemsize, out_itemsize,
                   vmem_budget_bytes=12 * 1024 * 1024, tb_max=2048,
                   min_tiles=4):
    """VMEM-layout-aware batch-tile selection.

    The x block is (k, TB, s_in) -> s_in lane-pads to 128; the out block is
    (k, TB, q)  -> q lane-pads to 128.  Both are double-buffered by the
    BlockSpec pipeline, so per row of TB the footprint is
        k * 2 * 128 * (x_itemsize + out_itemsize) bytes.
    The 12 MiB budget stays under v5e's 16 MiB default scoped VMEM (the
    smallest default of v5e/v6e/v7x), so the same sizing is safe per-TC on
    v7x as well.  Gains beyond TB ~ 1024-2048 are marginal, hence tb_max.
    """
    lane_s = _round_up(s_in, _LANE)
    lane_q = _round_up(q, _LANE)
    per_row = k * 2 * (lane_s * x_itemsize + lane_q * out_itemsize)
    cap = max(_SUBLANE,
              (vmem_budget_bytes // max(per_row, 1)) // _SUBLANE * _SUBLANE)
    tb = min(tb_max, cap)
    if b_flat <= tb:
        # Small problem: shrink the tile so the grid has >= min_tiles steps
        # and both v7x TensorCores get work (the grid axis is "parallel").
        tb = max(_SUBLANE, _round_up(pl.cdiv(b_flat, min_tiles), _SUBLANE))
    return tb


def emitter_forward(inputs, B_prepared, *, b_tile=None):
    """Forward pass of ProfileHMMEmitter.

    inputs:     (k, ..., s_in) float32 (one-hot-ish / soft sequences).
    B_prepared: (k, q, s_full) UNtransposed emission matrices, ideally already
                sliced by prepare_B_for_forward (s_full >= s_in).
    returns:    (k, ..., q) float32  ==  torch.einsum('kbs,ksq->kbq').
    """
    input_shape = inputs.shape
    k = input_shape[0]
    s_in = input_shape[-1]
    q = B_prepared.shape[1]

    x = inputs.reshape(k, -1, s_in)            # (k, b_flat, s_in) — view only
    b_flat = x.shape[1]

    # Defensive slice: a no-op when prepare_B_for_forward was used.
    b_mat = B_prepared[..., :s_in]             # (k, q, s_in) f32

    if b_tile is None:
        b_tile = _choose_b_tile(k, s_in, q, b_flat,
                                jnp.dtype(x.dtype).itemsize, 4)
    b_tile = max(_SUBLANE, _round_up(b_tile, _SUBLANE))

    # Ragged last tile handled by Pallas: no jnp.pad pass, and out-of-bounds
    # rows of the final output block are simply not written back.
    grid = (pl.cdiv(b_flat, b_tile),)

    emit = pl.pallas_call(
        _emit_kernel,
        out_shape=jax.ShapeDtypeStruct((k, b_flat, q), jnp.float32),
        grid_spec=pltpu.PrefetchScalarGridSpec(
            num_scalar_prefetch=0,
            grid=grid,
            in_specs=[
                # B: full, constant across the grid (tiny; fetched once).
                pl.BlockSpec((k, q, s_in), lambda j: (0, 0, 0)),
                # x: tiled along the flattened batch dim (dominant HBM read).
                pl.BlockSpec((k, b_tile, s_in), lambda j: (0, j, 0)),
            ],
            # Output written directly in the module's (k, b, q) layout.
            out_specs=pl.BlockSpec((k, b_tile, q), lambda j: (0, j, 0)),
        ),
        compiler_params=pltpu.CompilerParams(
            dimension_semantics=("parallel",)),
    )(b_mat, x)

    return emit.reshape((k,) + tuple(input_shape[1:-1]) + (q,))


# TODO(synk): prior / get_prior_log_density (AminoAcidPrior), get_aux_loss and
# the unused `end_hints` argument are not part of the forward compute path and
# are intentionally not implemented here.


# ----------------------------------------------------------------------------
# Demo / self-check
# ----------------------------------------------------------------------------
if __name__ == "__main__":
    # Configuration consistent with the module's literal padding rule:
    #   7 models, each length 3 -> q = 2*3+3 = 9 == len(lengths)+2 (padding 0)
    #   alphabet s = 25, so s_in = s + 1 = 26
    lengths = [3] * 7
    k = len(lengths)
    s = 25
    s_in = s + 1
    batch, seq = 2, 9          # b_flat = 18: exercises the ragged last tile

    key = jax.random.PRNGKey(0)
    keys = jax.random.split(key, 2 * k + 1)

    emission_kernels = [
        0.1 * jax.random.normal(keys[i], (lengths[i], s), dtype=jnp.float32)
        for i in range(k)
    ]
    insertion_kernels = [
        0.1 * jax.random.normal(keys[k + i], (s,), dtype=jnp.float32)
        for i in range(k)
    ]

    # recurrent_init(): build B once, slice once (off the hot path).
    B = make_B(emission_kernels, insertion_kernels, lengths)   # (k, q, s_in)
    B_prepared = prepare_B_for_forward(B, s_in)                # (k, q, s_in)

    # Example inputs (k, batch, seq, s_in).
    inputs = jax.random.uniform(keys[-1], (k, batch, seq, s_in),
                                dtype=jnp.float32)

    emit = jax.jit(emitter_forward)(inputs, B_prepared)
    emit = jax.block_until_ready(emit)

    # Reference: pure-f32 module semantics (highest-precision einsum).
    x_flat = inputs.reshape(k, -1, s_in)
    ref_f32 = jnp.einsum("kbs,kqs->kbq", x_flat, B[..., :s_in],
                         precision=jax.lax.Precision.HIGHEST)
    ref_f32 = ref_f32.reshape(emit.shape)

    assert emit.shape == (k, batch, seq, 2 * lengths[0] + 3), emit.shape
    assert bool(jnp.all(jnp.isfinite(emit))), "non-finite values in output"
    assert jnp.allclose(emit, ref_f32, atol=2e-2, rtol=2e-2), \
        "mismatch vs f32 reference"
    # Tighter sanity on the mean error (catches layout / slicing bugs).
    assert float(jnp.mean(jnp.abs(emit - ref_f32))) < 5e-3, \
        "mean error too large vs f32 reference"

    print("KERNEL_OK")
</pallas_src>

<mosaic_0001>
module attributes {stable_mosaic.version = 11 : i64} {
  func.func @_emit_kernel(%arg0: i32, %arg1: memref<7x9x26xf32, #tpu.memory_space<vmem>>, %arg2: memref<7x8x26xf32, #tpu.memory_space<vmem>>, %arg3: memref<7x8x9xf32, #tpu.memory_space<vmem>>) attributes {dimension_semantics = [#tpu.dimension_semantics<parallel>], iteration_bounds = array<i64: 3>, scalar_prefetch = 0 : i64, scratch_operands = 0 : i64, tpu.core_type = #tpu.core_type<tc>, window_params = [{pipeline_mode = #tpu.pipeline_mode<synchronous>, transform_indices = @transform_0, window_bounds = array<i64: 7, 9, 26>}, {transform_indices = @transform_1, window_bounds = array<i64: 7, 8, 26>}, {transform_indices = @transform_2, window_bounds = array<i64: 7, 8, 9>}]} {
    %c0 = arith.constant 0 : index
    %c0_0 = arith.constant 0 : index
    %c0_1 = arith.constant 0 : index
    %0 = vector.load %arg2[%c0, %c0_0, %c0_1] : memref<7x8x26xf32, #tpu.memory_space<vmem>>, vector<7x8x26xf32>
    %c0_2 = arith.constant 0 : index
    %c0_3 = arith.constant 0 : index
    %c0_4 = arith.constant 0 : index
    %1 = vector.load %arg1[%c0_2, %c0_3, %c0_4] : memref<7x9x26xf32, #tpu.memory_space<vmem>>, vector<7x9x26xf32>
    "tpu.trace_start"() <{level = 10 : i32, message = "kbs,kqs->kbq"}> : () -> ()
    %cst = arith.constant dense<0.000000e+00> : vector<7x8x9xf32>
    %2 = tpu.matmul %0, %1, %cst {dimension_numbers = #tpu.dot_dimension_numbers<[2], [2], [1], [1], [0, 0, 0, 1, 1, 1], [0], [0]>} : vector<7x8x26xf32>, vector<7x9x26xf32>, vector<7x8x9xf32> -> vector<7x8x9xf32>
    "tpu.trace_stop"() : () -> ()
    %c0_5 = arith.constant 0 : index
    %c0_6 = arith.constant 0 : index
    %c0_7 = arith.constant 0 : index
    %3 = vector.load %arg3[%c0_5, %c0_6, %c0_7] : memref<7x8x9xf32, #tpu.memory_space<vmem>>, vector<7x8x9xf32>
    tpu.vector_store %arg3[%c0_5, %c0_6, %c0_7], %2 {strides = array<i32>} : memref<7x8x9xf32, #tpu.memory_space<vmem>>, vector<7x8x9xf32>,
    return
  }
  func.func @transform_0(%arg0: i32) -> (i32, i32, i32) {
    %c0_i32 = arith.constant 0 : i32
    %c0_i32_0 = arith.constant 0 : i32
    %c0_i32_1 = arith.constant 0 : i32
    %c0_i32_2 = arith.constant 0 : i32
    return %c0_i32, %c0_i32_0, %c0_i32_1 : i32, i32, i32
  }
  func.func @transform_1(%arg0: i32) -> (i32, i32, i32) {
    %c0_i32 = arith.constant 0 : i32
    %c0_i32_0 = arith.constant 0 : i32
    %c0_i32_1 = arith.constant 0 : i32
    return %c0_i32, %arg0, %c0_i32_0 : i32, i32, i32
  }
  func.func @transform_2(%arg0: i32) -> (i32, i32, i32) {
    %c0_i32 = arith.constant 0 : i32
    %c0_i32_0 = arith.constant 0 : i32
    %c0_i32_1 = arith.constant 0 : i32
    return %c0_i32, %arg0, %c0_i32_0 : i32, i32, i32
  }
}

</mosaic_0001>

<llo_original>
// kernel: emitter_forward.1
$region0: #{emitter_forward.1}
  #allocation0 [shape = 'u32[]', space=smem, size = 0x4, offset = 0x4, fixed_abs, tag = 'smem constant byte address 0x4 - core index']
  #allocation1 [shape = 'u32[144,128]{1,0:T(1,128)}', space=vmem, size = 0x12000, scoped, tag = 'internal scratch']
  %s0 = inlined_call_operand.vmem [shape: f32[7,9,26], index: 0, kind: input, shape index: {}]
  %s1 = inlined_call_operand.vmem [shape: f32[7,18,26], index: 1, kind: input, shape index: {}]
  %s2 = inlined_call_operand.vmem [shape: f32[7,18,9], index: 2, kind: output, shape index: {}]
  %s3 = sld [smem:[#allocation0]]
  $region113: #{emitter_forward.1} parent=0
    _
  %s5 = ssub.s32 1, %s3
  %s6 = scalar_select 0, %s5, %s3
  $region1: #{emitter_forward.1} parent=0
    #allocation2 [shape = 'u8[57344]{0}', space=vmem, size = 0xe000, scoped, tag = 'input window, operand 1']
    #allocation3 [shape = 'u8[57344]{0}', space=vmem, size = 0xe000, scoped, tag = 'output window, operand 0']
    loop: start=0, step=1, limit=5
    $region2: #{emitter_forward.1} parent=1 // loop_pre_header
      _
    $region3: #{emitter_forward.1} parent=1 // loop_header
      %s8 = sphi 0, %s12
      %p9 = scmp.ge.s32.totalorder %s8, 5
      %s16 = sphi 0, %s16
      %s18 = sphi 0, %s16
      %s19 = sphi 0, %s18
      %s33 = sphi 0, %s19
      %s39 = sphi 0, %s41
      %s42 = sphi 0, %s39
      %s43 = sphi 0, %s42
      %s59 = sphi 0, %s43
      %s65 = sphi 0, %s67
      %s68 = sphi 0, %s65
      %s69 = sphi 0, %s68
      %s85 = sphi 0, %s69
    $region4: #{emitter_forward.1} parent=1 // loop_header_branch
      %11 = sbr.rel (%p9) target = $region8
    $region5: #{emitter_forward.1} parent=1 // loop_body
      %s13 = ssub.s32 %s8, 1
      %s14 = ssub.s32 %s8, 2
      %s15 = sadd.s32 %s8, 1
      %s17 = sadd.s32 %s16, 1
      %p20 = scmp.eq.s32.totalorder %s8, 2
      %p21 = scmp.ne.s32.totalorder %s16, %s18
      %p22 = scmp.eq.s32.totalorder %s8, 0
      %p23 = por %p21, %p22
      %p24 = scmp.ne.s32.totalorder %s16, %s18
      %p25 = scmp.eq.s32.totalorder %s13, 2
      %p26 = por %p24, %p25
      %p27 = scmp.ne.s32.totalorder %s18, %s19
      %p28 = scmp.eq.s32.totalorder %s13, 0
      %p29 = por %p27, %p28
      %p30 = scmp.ne.s32.totalorder %s18, %s19
      %p31 = scmp.eq.s32.totalorder %s14, 2
      %p32 = por %p30, %p31
      %p34 = scmp.ne.s32.totalorder %s19, %s33
      %p35 = scmp.eq.s32.totalorder %s14, 0
      %p36 = por %p34, %p35
      %s37 = ssub.s32 %s8, %s15
      %p38 = scmp.eq.s32.totalorder %s37, 0
      %s40 = sadd.s32 %s39, 1
      %s41 = scalar_select %p38, %s39, %s40
      %p44 = pneg %p38
      %p45 = scmp.eq.s32.totalorder %s8, 2
      %p46 = por %p44, %p45
      %p47 = scmp.ne.s32.totalorder %s39, %s42
      %p48 = scmp.eq.s32.totalorder %s8, 0
      %p49 = por %p47, %p48
      %p50 = scmp.ne.s32.totalorder %s39, %s42
      %p51 = scmp.eq.s32.totalorder %s13, 2
      %p52 = por %p50, %p51
      %p53 = scmp.ne.s32.totalorder %s42, %s43
      %p54 = scmp.eq.s32.totalorder %s13, 0
      %p55 = por %p53, %p54
      %p56 = scmp.ne.s32.totalorder %s42, %s43
      %p57 = scmp.eq.s32.totalorder %s14, 2
      %p58 = por %p56, %p57
      %p60 = scmp.ne.s32.totalorder %s43, %s59
      %p61 = scmp.eq.s32.totalorder %s14, 0
      %p62 = por %p60, %p61
      %s63 = ssub.s32 %s8, %s15
      %p64 = scmp.eq.s32.totalorder %s63, 0
      %s66 = sadd.s32 %s65, 1
      %s67 = scalar_select %p64, %s65, %s66
      %p70 = pneg %p64
      %p71 = scmp.eq.s32.totalorder %s8, 2
      %p72 = por %p70, %p71
      %p73 = scmp.ne.s32.totalorder %s65, %s68
      %p74 = scmp.eq.s32.totalorder %s8, 0
      %p75 = por %p73, %p74
      %p76 = scmp.ne.s32.totalorder %s65, %s68
      %p77 = scmp.eq.s32.totalorder %s13, 2
      %p78 = por %p76, %p77
      %p79 = scmp.ne.s32.totalorder %s68, %s69
      %p80 = scmp.eq.s32.totalorder %s13, 0
      %p81 = por %p79, %p80
      %p82 = scmp.ne.s32.totalorder %s68, %s69
      %p83 = scmp.eq.s32.totalorder %s14, 2
      %p84 = por %p82, %p83
      %p86 = scmp.ne.s32.totalorder %s69, %s85
      %p87 = scmp.eq.s32.totalorder %s14, 0
      %p88 = por %p86, %p87
      %p89 = scmp.le.s32.totalorder 1, %s8
      %p90 = scmp.lt.s32.totalorder %s8, 4
      %p91 = pnand %p89, %p90
      %p92 = pneg %p91
      // Predicated region
      $region9: #{emitter_forward.1} parent=5 // pred_check
        _
      $region10: #{emitter_forward.1} parent=5 // pred_check_branch
        %94 = sbr.rel (%p91) target = $region12
      $region11: #{emitter_forward.1} parent=5 // pred_region
        %s95 = ssub.s32 %s8, 1
        // Predicated region
        $region13: #{emitter_forward.1} parent=11 // pred_check
          %p96 = pneg %p29
        $region14: #{emitter_forward.1} parent=11 // pred_check_branch
          %98 = sbr.rel (%p96) target = $region16
        $region15: #{emitter_forward.1} parent=11 // pred_region
          _
        $region16: #{emitter_forward.1} parent=11 // pred_fallthru
          _
      $region12: #{emitter_forward.1} parent=5 // pred_fallthru
        _
      %p99 = scmp.lt.s32.totalorder %s8, 3
      // Predicated region
      $region17: #{emitter_forward.1} parent=5 // pred_check
        %p100 = pneg %p99
      $region18: #{emitter_forward.1} parent=5 // pred_check_branch
        %102 = sbr.rel (%p100) target = $region20
      $region19: #{emitter_forward.1} parent=5 // pred_region
        // Predicated region
        $region21: #{emitter_forward.1} parent=19 // pred_check
          %p103 = pneg %p49
        $region22: #{emitter_forward.1} parent=19 // pred_check_branch
          %105 = sbr.rel (%p103) target = $region24
        $region23: #{emitter_forward.1} parent=19 // pred_region
          %s106 = sand.u32 %s39, 1
          %s107 = sand.u32 %s39, 1
          %s108 = smul.addr %s107, 56
          %s109 = scalar_lea.vmem [#allocation2], %s108
          %s110 = smul.addr %s8, 8
          %s111 = scalar_lea.vmem %s1, %s110
          // Predicated region
          $region25: #{emitter_forward.1} parent=23 // pred_check
            _
          $region26: #{emitter_forward.1} parent=23 // pred_check_branch
            %113 = sbr.rel (0) target = $region28
          $region27: #{emitter_forward.1} parent=23 // pred_region
            // Predicated region
            $region29: #{emitter_forward.1} parent=27 // pred_check
              _
            $region30: #{emitter_forward.1} parent=27 // pred_check_branch
              %115 = sbr.rel (0) target = $region32
            $region31: #{emitter_forward.1} parent=27 // pred_region
              // Predicated region
              $region44: #{emitter_forward.1} parent=31 // pred_check
                _
              $region45: #{emitter_forward.1} parent=31 // pred_check_branch
                %142 = sbr.rel (0) target = $region47
              $region46: #{emitter_forward.1} parent=31 // pred_region
                loop: start=0, step=1, limit=1
                $region48: #{emitter_forward.1} parent=46 // loop_pre_header
                  _
                $region49: #{emitter_forward.1} parent=46 // loop_header
                  %s144 = sphi 0, %s148
                  %p145 = scmp.ge.s32.totalorder %s144, 1
                  %s149 = sphi %s111, %s111
                  %s150 = sphi %s109, %s109
                $region50: #{emitter_forward.1} parent=46 // loop_header_branch
                  %147 = sbr.rel (%p145) target = $region54
                $region51: #{emitter_forward.1} parent=46 // loop_body
                  %v151 = vld [vmem:[%s149] sm:$0xff]
                  %152 = vst [vmem:[%s150] sm:$0xff] %v151
                  %v153 = vld [vmem:[%s149 + $0x18] sm:$0xff]
                  %154 = vst [vmem:[%s150 + $0x8] sm:$0xff] %v153
                  %v155 = vld [vmem:[%s149 + $0x30] sm:$0xff]
                  %156 = vst [vmem:[%s150 + $0x10] sm:$0xff] %v155
                  %v157 = vld [vmem:[%s149 + $0x48] sm:$0xff]
                  %158 = vst [vmem:[%s150 + $0x18] sm:$0xff] %v157
                  %v159 = vld [vmem:[%s149 + $0x60] sm:$0xff]
                  %160 = vst [vmem:[%s150 + $0x20] sm:$0xff] %v159
                  %v161 = vld [vmem:[%s149 + $0x78] sm:$0xff]
                  %162 = vst [vmem:[%s150 + $0x28] sm:$0xff] %v161
                  %v163 = vld [vmem:[%s149 + $0x90] sm:$0xff]
                  %164 = vst [vmem:[%s150 + $0x30] sm:$0xff] %v163
                $region52: #{emitter_forward.1} parent=46 // loop_footer
                  %s148 = sadd.s32 1, %s144
                $region53: #{emitter_forward.1} parent=46 // loop_footer_branch
                  %143 = sbr.rel target = $region49
                $region54: #{emitter_forward.1} parent=46 // loop_exit
                  _
              $region47: #{emitter_forward.1} parent=31 // pred_fallthru
                _
              // Predicated region
              $region55: #{emitter_forward.1} parent=31 // pred_check
                _
              $region56: #{emitter_forward.1} parent=31 // pred_check_branch
                %166 = sbr.rel target = $region58
              $region57: #{emitter_forward.1} parent=31 // pred_region
                _
              $region58: #{emitter_forward.1} parent=31 // pred_fallthru
                _
            $region32: #{emitter_forward.1} parent=27 // pred_fallthru
              _
            // Predicated region
            $region33: #{emitter_forward.1} parent=27 // pred_check
              _
            $region34: #{emitter_forward.1} parent=27 // pred_check_branch
              %117 = sbr.rel target = $region36
            $region35: #{emitter_forward.1} parent=27 // pred_region
              loop: start=0, step=1, limit=1
              $region37: #{emitter_forward.1} parent=35 // loop_pre_header
                _
              $region38: #{emitter_forward.1} parent=35 // loop_header
                %s120 = sphi 0, %s124
                %p121 = scmp.ge.s32.totalorder %s120, 1
                %s125 = sphi %s111, %s111
                %s126 = sphi %s109, %s109
              $region39: #{emitter_forward.1} parent=35 // loop_header_branch
                %123 = sbr.rel (%p121) target = $region43
              $region40: #{emitter_forward.1} parent=35 // loop_body
                %v127 = vld [vmem:[%s125] sm:$0xff]
                %128 = vst [vmem:[%s126] sm:$0xff] %v127
                %v129 = vld [vmem:[%s125 + $0x18] sm:$0xff]
                %130 = vst [vmem:[%s126 + $0x8] sm:$0xff] %v129
                %v131 = vld [vmem:[%s125 + $0x30] sm:$0xff]
                %132 = vst [vmem:[%s126 + $0x10] sm:$0xff] %v131
                %v133 = vld [vmem:[%s125 + $0x48] sm:$0xff]
                %134 = vst [vmem:[%s126 + $0x18] sm:$0xff] %v133
                %v135 = vld [vmem:[%s125 + $0x60] sm:$0xff]
                %136 = vst [vmem:[%s126 + $0x20] sm:$0xff] %v135
                %v137 = vld [vmem:[%s125 + $0x78] sm:$0xff]
                %138 = vst [vmem:[%s126 + $0x28] sm:$0xff] %v137
                %v139 = vld [vmem:[%s125 + $0x90] sm:$0xff]
                %140 = vst [vmem:[%s126 + $0x30] sm:$0xff] %v139
              $region41: #{emitter_forward.1} parent=35 // loop_footer
                %s124 = sadd.s32 1, %s120
              $region42: #{emitter_forward.1} parent=35 // loop_footer_branch
                %119 = sbr.rel target = $region38
              $region43: #{emitter_forward.1} parent=35 // loop_exit
                _
            $region36: #{emitter_forward.1} parent=27 // pred_fallthru
              _
          $region28: #{emitter_forward.1} parent=23 // pred_fallthru
            _
          %167 = vnop
        $region24: #{emitter_forward.1} parent=19 // pred_fallthru
          _
      $region20: #{emitter_forward.1} parent=5 // pred_fallthru
        _
      %p168 = scmp.le.s32.totalorder 1, %s8
      %p169 = scmp.lt.s32.totalorder %s8, 4
      %p170 = pnand %p168, %p169
      %p171 = pneg %p170
      // Predicated region
      $region59: #{emitter_forward.1} parent=5 // pred_check
        _
      $region60: #{emitter_forward.1} parent=5 // pred_check_branch
        %173 = sbr.rel (%p170) target = $region62
      $region61: #{emitter_forward.1} parent=5 // pred_region
        %s174 = ssub.s32 %s8, 1
        %s175 = sand.u32 %s42, 1
        %s176 = sand.u32 %s42, 1
        %s177 = smul.addr %s176, 56
        %s178 = scalar_lea.vmem [#allocation2], %s177
        // Predicated region
        $region63: #{emitter_forward.1} parent=61 // pred_check
          %p179 = pneg %p55
        $region64: #{emitter_forward.1} parent=61 // pred_check_branch
          %181 = sbr.rel (%p179) target = $region66
        $region65: #{emitter_forward.1} parent=61 // pred_region
          _
        $region66: #{emitter_forward.1} parent=61 // pred_fallthru
          _
        %p182 = pneg %p29
        %p183 = pneg %p26
        %s184 = sand.u32 %s42, 1
        %s185 = sand.u32 %s42, 1
        %s186 = smul.addr %s185, 56
        %s187 = scalar_lea.vmem [#allocation2], %s186
        %p188 = pneg %p55
        %p189 = pneg %p52
        %p190 = pneg %p81
        %p191 = pneg %p78
        %s192 = sand.u32 %s68, 1
        %s193 = sand.u32 %s68, 1
        %s194 = smul.addr %s193, 56
        %s195 = scalar_lea.vmem [#allocation3], %s194
        %v196 = vld [vmem:[%s178] sm:$0xff]
        %v197 = vld [vmem:[%s178 + $0x8] sm:$0xff]
        %v198 = vld [vmem:[%s178 + $0x10] sm:$0xff]
        %v199 = vld [vmem:[%s178 + $0x18] sm:$0xff]
        %v200 = vld [vmem:[%s178 + $0x20] sm:$0xff]
        %v201 = vld [vmem:[%s178 + $0x28] sm:$0xff]
        %v202 = vld [vmem:[%s178 + $0x30] sm:$0xff]
        %v203 = vld [vmem:[%s0] sm:$0xff]
        %v204 = vld [vmem:[%s0 + $0x8] sm:$0x1]
        %v205 = vld [vmem:[%s0 + $0x10] sm:$0xff]
        %v206 = vld [vmem:[%s0 + $0x18] sm:$0x1]
        %v207 = vld [vmem:[%s0 + $0x20] sm:$0xff]
        %v208 = vld [vmem:[%s0 + $0x28] sm:$0x1]
        %v209 = vld [vmem:[%s0 + $0x30] sm:$0xff]
        %v210 = vld [vmem:[%s0 + $0x38] sm:$0x1]
        %v211 = vld [vmem:[%s0 + $0x40] sm:$0xff]
        %v212 = vld [vmem:[%s0 + $0x48] sm:$0x1]
        %v213 = vld [vmem:[%s0 + $0x50] sm:$0xff]
        %v214 = vld [vmem:[%s0 + $0x58] sm:$0x1]
        %v215 = vld [vmem:[%s0 + $0x60] sm:$0xff]
        %v216 = vld [vmem:[%s0 + $0x68] sm:$0x1]
        %vm217 = vcmask 211968
        %v219 = vsel %vm217, %v196, 0
        %v222 = vsel %vm217, %v203, 0
        %v225 = vsel %vm217, %v204, 0
        %227 = vmatprep.subr.mxu0 0.0
        %228 = vmatpush1.xpose.msra.mxu0 %v222
        %229 = vmatprep.subr.mxu0 0.0
        %230 = vmatpush1.xpose.msra.mxu0 %v225
        %231 = vmatprep.subr.mxu0 0.0
        %232 = vmatpush1.xpose.msra.mxu0 0.0
        %233 = vmatprep.subr.mxu0 0.0
        %234 = vmatpush1.xpose.msra.mxu0 0.0
        %235 = vmatprep.subr.mxu0 0.0
        %236 = vmatpush1.xpose.msra.mxu0 0.0
        %237 = vmatprep.subr.mxu0 0.0
        %238 = vmatpush1.xpose.msra.mxu0 0.0
        %239 = vmatprep.subr.mxu0 0.0
        %240 = vmatpush1.xpose.msra.mxu0 0.0
        %241 = vmatprep.subr.mxu0 0.0
        %242 = vmatpush1.xpose.msra.mxu0 0.0
        %243 = vmatprep.subr.mxu0 0.0
        %244 = vmatpush1.xpose.msra.mxu0 0.0
        %245 = vmatprep.subr.mxu0 0.0
        %246 = vmatpush1.xpose.msra.mxu0 0.0
        %247 = vmatprep.subr.mxu0 0.0
        %248 = vmatpush1.xpose.msra.mxu0 0.0
        %249 = vmatprep.subr.mxu0 0.0
        %250 = vmatpush1.xpose.msra.mxu0 0.0
        %251 = vmatprep.subr.mxu0 0.0
        %252 = vmatpush1.xpose.msra.mxu0 0.0
        %253 = vmatprep.subr.mxu0 0.0
        %254 = vmatpush1.xpose.msra.mxu0 0.0
        %255 = vmatprep.subr.mxu0 0.0
        %256 = vmatpush1.xpose.msra.mxu0 0.0
        %257 = vmatprep.subr.mxu0 0.0
        %258 = vmatpush1.xpose.msra.mxu0 0.0
        %259 = vmatprep.subr.mxu0 0.0
        %260 = vmatpush1.xpose.msra.mxu0 0.0
        %261 = vmatprep.subr.mxu0 0.0
        %262 = vmatpush1.xpose.msra.mxu0 0.0
        %263 = vmatprep.subr.mxu0 0.0
        %264 = vmatpush1.xpose.msra.mxu0 0.0
        %265 = vmatprep.subr.mxu0 0.0
        %266 = vmatpush1.xpose.msra.mxu0 0.0
        %267 = vmatprep.subr.mxu0 0.0
        %268 = vmatpush1.xpose.msra.mxu0 0.0
        %269 = vmatprep.subr.mxu0 0.0
        %270 = vmatpush1.xpose.msra.mxu0 0.0
        %271 = vmatprep.subr.mxu0 0.0
        %272 = vmatpush1.xpose.msra.mxu0 0.0
        %273 = vmatprep.subr.mxu0 0.0
        %274 = vmatpush1.xpose.msra.mxu0 0.0
        %275 = vmatprep.subr.mxu0 0.0
        %276 = vmatpush1.xpose.msra.mxu0 0.0
        %277 = vmatprep.subr.mxu0 0.0
        %278 = vmatpush1.xpose.msra.mxu0 0.0
        %279 = vmatprep.subr.mxu0 0.0
        %280 = vmatpush1.xpose.msra.mxu0 0.0
        %281 = vmatprep.subr.mxu0 0.0
        %282 = vmatpush1.xpose.msra.mxu0 0.0
        %283 = vmatprep.subr.mxu0 0.0
        %284 = vmatpush1.xpose.msra.mxu0 0.0
        %285 = vmatprep.subr.mxu0 0.0
        %286 = vmatpush1.xpose.msra.mxu0 0.0
        %287 = vmatprep.subr.mxu0 0.0
        %288 = vmatpush1.xpose.msra.mxu0 0.0
        %289 = vmatprep.subr.mxu0 0.0
        %290 = vmatpush1.xpose.msra.mxu0 0.0
        %291 = vmatprep.mubr.f32.mxu0 0.0
        %292 = vmatmul.mubr.f32.gmra.mrb[0].mxu0 %v219
        %v293 = vpop.f32.mrb[0].mxu0
        %v294 = vadd.f32 0.0, %v293
        %v295 = vpop.f32.mrb[0].mxu0
        %296 = vdwg.mxu0
        %v298 = vsel %vm217, %v197, 0
        %v301 = vsel %vm217, %v205, 0
        %v304 = vsel %vm217, %v206, 0
        %306 = vmatprep.subr.mxu0 0.0
        %307 = vmatpush1.xpose.msra.mxu0 %v301
        %308 = vmatprep.subr.mxu0 0.0
        %309 = vmatpush1.xpose.msra.mxu0 %v304
        %310 = vmatprep.subr.mxu0 0.0
        %311 = vmatpush1.xpose.msra.mxu0 0.0
        %312 = vmatprep.subr.mxu0 0.0
        %313 = vmatpush1.xpose.msra.mxu0 0.0
        %314 = vmatprep.subr.mxu0 0.0
        %315 = vmatpush1.xpose.msra.mxu0 0.0
        %316 = vmatprep.subr.mxu0 0.0
        %317 = vmatpush1.xpose.msra.mxu0 0.0
        %318 = vmatprep.subr.mxu0 0.0
        %319 = vmatpush1.xpose.msra.mxu0 0.0
        %320 = vmatprep.subr.mxu0 0.0
        %321 = vmatpush1.xpose.msra.mxu0 0.0
        %322 = vmatprep.subr.mxu0 0.0
        %323 = vmatpush1.xpose.msra.mxu0 0.0
        %324 = vmatprep.subr.mxu0 0.0
        %325 = vmatpush1.xpose.msra.mxu0 0.0
        %326 = vmatprep.subr.mxu0 0.0
        %327 = vmatpush1.xpose.msra.mxu0 0.0
        %328 = vmatprep.subr.mxu0 0.0
        %329 = vmatpush1.xpose.msra.mxu0 0.0
        %330 = vmatprep.subr.mxu0 0.0
        %331 = vmatpush1.xpose.msra.mxu0 0.0
        %332 = vmatprep.subr.mxu0 0.0
        %333 = vmatpush1.xpose.msra.mxu0 0.0
        %334 = vmatprep.subr.mxu0 0.0
        %335 = vmatpush1.xpose.msra.mxu0 0.0
        %336 = vmatprep.subr.mxu0 0.0
        %337 = vmatpush1.xpose.msra.mxu0 0.0
        %338 = vmatprep.subr.mxu0 0.0
        %339 = vmatpush1.xpose.msra.mxu0 0.0
        %340 = vmatprep.subr.mxu0 0.0
        %341 = vmatpush1.xpose.msra.mxu0 0.0
        %342 = vmatprep.subr.mxu0 0.0
        %343 = vmatpush1.xpose.msra.mxu0 0.0
        %344 = vmatprep.subr.mxu0 0.0
        %345 = vmatpush1.xpose.msra.mxu0 0.0
        %346 = vmatprep.subr.mxu0 0.0
        %347 = vmatpush1.xpose.msra.mxu0 0.0
        %348 = vmatprep.subr.mxu0 0.0
        %349 = vmatpush1.xpose.msra.mxu0 0.0
        %350 = vmatprep.subr.mxu0 0.0
        %351 = vmatpush1.xpose.msra.mxu0 0.0
        %352 = vmatprep.subr.mxu0 0.0
        %353 = vmatpush1.xpose.msra.mxu0 0.0
        %354 = vmatprep.subr.mxu0 0.0
        %355 = vmatpush1.xpose.msra.mxu0 0.0
        %356 = vmatprep.subr.mxu0 0.0
        %357 = vmatpush1.xpose.msra.mxu0 0.0
        %358 = vmatprep.subr.mxu0 0.0
        %359 = vmatpush1.xpose.msra.mxu0 0.0
        %360 = vmatprep.subr.mxu0 0.0
        %361 = vmatpush1.xpose.msra.mxu0 0.0
        %362 = vmatprep.subr.mxu0 0.0
        %363 = vmatpush1.xpose.msra.mxu0 0.0
        %364 = vmatprep.subr.mxu0 0.0
        %365 = vmatpush1.xpose.msra.mxu0 0.0
        %366 = vmatprep.subr.mxu0 0.0
        %367 = vmatpush1.xpose.msra.mxu0 0.0
        %368 = vmatprep.subr.mxu0 0.0
        %369 = vmatpush1.xpose.msra.mxu0 0.0
        %370 = vmatprep.mubr.f32.mxu0 0.0
        %371 = vmatmul.mubr.f32.gmra.mrb[0].mxu0 %v298
        %v372 = vpop.f32.mrb[0].mxu0
        %v373 = vadd.f32 0.0, %v372
        %v374 = vpop.f32.mrb[0].mxu0
        %375 = vdwg.mxu0
        %v377 = vsel %vm217, %v198, 0
        %v380 = vsel %vm217, %v207, 0
        %v383 = vsel %vm217, %v208, 0
        %385 = vmatprep.subr.mxu0 0.0
        %386 = vmatpush1.xpose.msra.mxu0 %v380
        %387 = vmatprep.subr.mxu0 0.0
        %388 = vmatpush1.xpose.msra.mxu0 %v383
        %389 = vmatprep.subr.mxu0 0.0
        %390 = vmatpush1.xpose.msra.mxu0 0.0
        %391 = vmatprep.subr.mxu0 0.0
        %392 = vmatpush1.xpose.msra.mxu0 0.0
        %393 = vmatprep.subr.mxu0 0.0
        %394 = vmatpush1.xpose.msra.mxu0 0.0
        %395 = vmatprep.subr.mxu0 0.0
        %396 = vmatpush1.xpose.msra.mxu0 0.0
        %397 = vmatprep.subr.mxu0 0.0
        %398 = vmatpush1.xpose.msra.mxu0 0.0
        %399 = vmatprep.subr.mxu0 0.0
        %400 = vmatpush1.xpose.msra.mxu0 0.0
        %401 = vmatprep.subr.mxu0 0.0
        %402 = vmatpush1.xpose.msra.mxu0 0.0
        %403 = vmatprep.subr.mxu0 0.0
        %404 = vmatpush1.xpose.msra.mxu0 0.0
        %405 = vmatprep.subr.mxu0 0.0
        %406 = vmatpush1.xpose.msra.mxu0 0.0
        %407 = vmatprep.subr.mxu0 0.0
        %408 = vmatpush1.xpose.msra.mxu0 0.0
        %409 = vmatprep.subr.mxu0 0.0
        %410 = vmatpush1.xpose.msra.mxu0 0.0
        %411 = vmatprep.subr.mxu0 0.0
        %412 = vmatpush1.xpose.msra.mxu0 0.0
        %413 = vmatprep.subr.mxu0 0.0
        %414 = vmatpush1.xpose.msra.mxu0 0.0
        %415 = vmatprep.subr.mxu0 0.0
        %416 = vmatpush1.xpose.msra.mxu0 0.0
        %417 = vmatprep.subr.mxu0 0.0
        %418 = vmatpush1.xpose.msra.mxu0 0.0
        %419 = vmatprep.subr.mxu0 0.0
        %420 = vmatpush1.xpose.msra.mxu0 0.0
        %421 = vmatprep.subr.mxu0 0.0
        %422 = vmatpush1.xpose.msra.mxu0 0.0
        %423 = vmatprep.subr.mxu0 0.0
        %424 = vmatpush1.xpose.msra.mxu0 0.0
        %425 = vmatprep.subr.mxu0 0.0
        %426 = vmatpush1.xpose.msra.mxu0 0.0
        %427 = vmatprep.subr.mxu0 0.0
        %428 = vmatpush1.xpose.msra.mxu0 0.0
        %429 = vmatprep.subr.mxu0 0.0
        %430 = vmatpush1.xpose.msra.mxu0 0.0
        %431 = vmatprep.subr.mxu0 0.0
        %432 = vmatpush1.xpose.msra.mxu0 0.0
        %433 = vmatprep.subr.mxu0 0.0
        %434 = vmatpush1.xpose.msra.mxu0 0.0
        %435 = vmatprep.subr.mxu0 0.0
        %436 = vmatpush1.xpose.msra.mxu0 0.0
        %437 = vmatprep.subr.mxu0 0.0
        %438 = vmatpush1.xpose.msra.mxu0 0.0
        %439 = vmatprep.subr.mxu0 0.0
        %440 = vmatpush1.xpose.msra.mxu0 0.0
        %441 = vmatprep.subr.mxu0 0.0
        %442 = vmatpush1.xpose.msra.mxu0 0.0
        %443 = vmatprep.subr.mxu0 0.0
        %444 = vmatpush1.xpose.msra.mxu0 0.0
        %445 = vmatprep.subr.mxu0 0.0
        %446 = vmatpush1.xpose.msra.mxu0 0.0
        %447 = vmatprep.subr.mxu0 0.0
        %448 = vmatpush1.xpose.msra.mxu0 0.0
        %449 = vmatprep.mubr.f32.mxu0 0.0
        %450 = vmatmul.mubr.f32.gmra.mrb[0].mxu0 %v377
        %v451 = vpop.f32.mrb[0].mxu0
        %v452 = vadd.f32 0.0, %v451
        %v453 = vpop.f32.mrb[0].mxu0
        %454 = vdwg.mxu0
        %v456 = vsel %vm217, %v199, 0
        %v459 = vsel %vm217, %v209, 0
        %v462 = vsel %vm217, %v210, 0
        %464 = vmatprep.subr.mxu0 0.0
        %465 = vmatpush1.xpose.msra.mxu0 %v459
        %466 = vmatprep.subr.mxu0 0.0
        %467 = vmatpush1.xpose.msra.mxu0 %v462
        %468 = vmatprep.subr.mxu0 0.0
        %469 = vmatpush1.xpose.msra.mxu0 0.0
        %470 = vmatprep.subr.mxu0 0.0
        %471 = vmatpush1.xpose.msra.mxu0 0.0
        %472 = vmatprep.subr.mxu0 0.0
        %473 = vmatpush1.xpose.msra.mxu0 0.0
        %474 = vmatprep.subr.mxu0 0.0
        %475 = vmatpush1.xpose.msra.mxu0 0.0
        %476 = vmatprep.subr.mxu0 0.0
        %477 = vmatpush1.xpose.msra.mxu0 0.0
        %478 = vmatprep.subr.mxu0 0.0
        %479 = vmatpush1.xpose.msra.mxu0 0.0
        %480 = vmatprep.subr.mxu0 0.0
        %481 = vmatpush1.xpose.msra.mxu0 0.0
        %482 = vmatprep.subr.mxu0 0.0
        %483 = vmatpush1.xpose.msra.mxu0 0.0
        %484 = vmatprep.subr.mxu0 0.0
        %485 = vmatpush1.xpose.msra.mxu0 0.0
        %486 = vmatprep.subr.mxu0 0.0
        %487 = vmatpush1.xpose.msra.mxu0 0.0
        %488 = vmatprep.subr.mxu0 0.0
        %489 = vmatpush1.xpose.msra.mxu0 0.0
        %490 = vmatprep.subr.mxu0 0.0
        %491 = vmatpush1.xpose.msra.mxu0 0.0
        %492 = vmatprep.subr.mxu0 0.0
        %493 = vmatpush1.xpose.msra.mxu0 0.0
        %494 = vmatprep.subr.mxu0 0.0
        %495 = vmatpush1.xpose.msra.mxu0 0.0
        %496 = vmatprep.subr.mxu0 0.0
        %497 = vmatpush1.xpose.msra.mxu0 0.0
        %498 = vmatprep.subr.mxu0 0.0
        %499 = vmatpush1.xpose.msra.mxu0 0.0
        %500 = vmatprep.subr.mxu0 0.0
        %501 = vmatpush1.xpose.msra.mxu0 0.0
        %502 = vmatprep.subr.mxu0 0.0
        %503 = vmatpush1.xpose.msra.mxu0 0.0
        %504 = vmatprep.subr.mxu0 0.0
        %505 = vmatpush1.xpose.msra.mxu0 0.0
        %506 = vmatprep.subr.mxu0 0.0
        %507 = vmatpush1.xpose.msra.mxu0 0.0
        %508 = vmatprep.subr.mxu0 0.0
        %509 = vmatpush1.xpose.msra.mxu0 0.0
        %510 = vmatprep.subr.mxu0 0.0
        %511 = vmatpush1.xpose.msra.mxu0 0.0
        %512 = vmatprep.subr.mxu0 0.0
        %513 = vmatpush1.xpose.msra.mxu0 0.0
        %514 = vmatprep.subr.mxu0 0.0
        %515 = vmatpush1.xpose.msra.mxu0 0.0
        %516 = vmatprep.subr.mxu0 0.0
        %517 = vmatpush1.xpose.msra.mxu0 0.0
        %518 = vmatprep.subr.mxu0 0.0
        %519 = vmatpush1.xpose.msra.mxu0 0.0
        %520 = vmatprep.subr.mxu0 0.0
        %521 = vmatpush1.xpose.msra.mxu0 0.0
        %522 = vmatprep.subr.mxu0 0.0
        %523 = vmatpush1.xpose.msra.mxu0 0.0
        %524 = vmatprep.subr.mxu0 0.0
        %525 = vmatpush1.xpose.msra.mxu0 0.0
        %526 = vmatprep.subr.mxu0 0.0
        %527 = vmatpush1.xpose.msra.mxu0 0.0
        %528 = vmatprep.mubr.f32.mxu0 0.0
        %529 = vmatmul.mubr.f32.gmra.mrb[0].mxu0 %v456
        %v530 = vpop.f32.mrb[0].mxu0
        %v531 = vadd.f32 0.0, %v530
        %v532 = vpop.f32.mrb[0].mxu0
        %533 = vdwg.mxu0
        %v535 = vsel %vm217, %v200, 0
        %v538 = vsel %vm217, %v211, 0
        %v541 = vsel %vm217, %v212, 0
        %543 = vmatprep.subr.mxu0 0.0
        %544 = vmatpush1.xpose.msra.mxu0 %v538
        %545 = vmatprep.subr.mxu0 0.0
        %546 = vmatpush1.xpose.msra.mxu0 %v541
        %547 = vmatprep.subr.mxu0 0.0
        %548 = vmatpush1.xpose.msra.mxu0 0.0
        %549 = vmatprep.subr.mxu0 0.0
        %550 = vmatpush1.xpose.msra.mxu0 0.0
        %551 = vmatprep.subr.mxu0 0.0
        %552 = vmatpush1.xpose.msra.mxu0 0.0
        %553 = vmatprep.subr.mxu0 0.0
        %554 = vmatpush1.xpose.msra.mxu0 0.0
        %555 = vmatprep.subr.mxu0 0.0
        %556 = vmatpush1.xpose.msra.mxu0 0.0
        %557 = vmatprep.subr.mxu0 0.0
        %558 = vmatpush1.xpose.msra.mxu0 0.0
        %559 = vmatprep.subr.mxu0 0.0
        %560 = vmatpush1.xpose.msra.mxu0 0.0
        %561 = vmatprep.subr.mxu0 0.0
        %562 = vmatpush1.xpose.msra.mxu0 0.0
        %563 = vmatprep.subr.mxu0 0.0
        %564 = vmatpush1.xpose.msra.mxu0 0.0
        %565 = vmatprep.subr.mxu0 0.0
        %566 = vmatpush1.xpose.msra.mxu0 0.0
        %567 = vmatprep.subr.mxu0 0.0
        %568 = vmatpush1.xpose.msra.mxu0 0.0
        %569 = vmatprep.subr.mxu0 0.0
        %570 = vmatpush1.xpose.msra.mxu0 0.0
        %571 = vmatprep.subr.mxu0 0.0
        %572 = vmatpush1.xpose.msra.mxu0 0.0
        %573 = vmatprep.subr.mxu0 0.0
        %574 = vmatpush1.xpose.msra.mxu0 0.0
        %575 = vmatprep.subr.mxu0 0.0
        %576 = vmatpush1.xpose.msra.mxu0 0.0
        %577 = vmatprep.subr.mxu0 0.0
        %578 = vmatpush1.xpose.msra.mxu0 0.0
        %579 = vmatprep.subr.mxu0 0.0
        %580 = vmatpush1.xpose.msra.mxu0 0.0
        %581 = vmatprep.subr.mxu0 0.0
        %582 = vmatpush1.xpose.msra.mxu0 0.0
        %583 = vmatprep.subr.mxu0 0.0
        %584 = vmatpush1.xpose.msra.mxu0 0.0
        %585 = vmatprep.subr.mxu0 0.0
        %586 = vmatpush1.xpose.msra.mxu0 0.0
        %587 = vmatprep.subr.mxu0 0.0
        %588 = vmatpush1.xpose.msra.mxu0 0.0
        %589 = vmatprep.subr.mxu0 0.0
        %590 = vmatpush1.xpose.msra.mxu0 0.0
        %591 = vmatprep.subr.mxu0 0.0
        %592 = vmatpush1.xpose.msra.mxu0 0.0
        %593 = vmatprep.subr.mxu0 0.0
        %594 = vmatpush1.xpose.msra.mxu0 0.0
        %595 = vmatprep.subr.mxu0 0.0
        %596 = vmatpush1.xpose.msra.mxu0 0.0
        %597 = vmatprep.subr.mxu0 0.0
        %598 = vmatpush1.xpose.msra.mxu0 0.0
        %599 = vmatprep.subr.mxu0 0.0
        %600 = vmatpush1.xpose.msra.mxu0 0.0
        %601 = vmatprep.subr.mxu0 0.0
        %602 = vmatpush1.xpose.msra.mxu0 0.0
        %603 = vmatprep.subr.mxu0 0.0
        %604 = vmatpush1.xpose.msra.mxu0 0.0
        %605 = vmatprep.subr.mxu0 0.0
        %606 = vmatpush1.xpose.msra.mxu0 0.0
        %607 = vmatprep.mubr.f32.mxu0 0.0
        %608 = vmatmul.mubr.f32.gmra.mrb[0].mxu0 %v535
        %v609 = vpop.f32.mrb[0].mxu0
        %v610 = vadd.f32 0.0, %v609
        %v611 = vpop.f32.mrb[0].mxu0
        %612 = vdwg.mxu0
        %v614 = vsel %vm217, %v201, 0
        %v617 = vsel %vm217, %v213, 0
        %v620 = vsel %vm217, %v214, 0
        %622 = vmatprep.subr.mxu0 0.0
        %623 = vmatpush1.xpose.msra.mxu0 %v617
        %624 = vmatprep.subr.mxu0 0.0
        %625 = vmatpush1.xpose.msra.mxu0 %v620
        %626 = vmatprep.subr.mxu0 0.0
        %627 = vmatpush1.xpose.msra.mxu0 0.0
        %628 = vmatprep.subr.mxu0 0.0
        %629 = vmatpush1.xpose.msra.mxu0 0.0
        %630 = vmatprep.subr.mxu0 0.0
        %631 = vmatpush1.xpose.msra.mxu0 0.0
        %632 = vmatprep.subr.mxu0 0.0
        %633 = vmatpush1.xpose.msra.mxu0 0.0
        %634 = vmatprep.subr.mxu0 0.0
        %635 = vmatpush1.xpose.msra.mxu0 0.0
        %636 = vmatprep.subr.mxu0 0.0
        %637 = vmatpush1.xpose.msra.mxu0 0.0
        %638 = vmatprep.subr.mxu0 0.0
        %639 = vmatpush1.xpose.msra.mxu0 0.0
        %640 = vmatprep.subr.mxu0 0.0
        %641 = vmatpush1.xpose.msra.mxu0 0.0
        %642 = vmatprep.subr.mxu0 0.0
        %643 = vmatpush1.xpose.msra.mxu0 0.0
        %644 = vmatprep.subr.mxu0 0.0
        %645 = vmatpush1.xpose.msra.mxu0 0.0
        %646 = vmatprep.subr.mxu0 0.0
        %647 = vmatpush1.xpose.msra.mxu0 0.0
        %648 = vmatprep.subr.mxu0 0.0
        %649 = vmatpush1.xpose.msra.mxu0 0.0
        %650 = vmatprep.subr.mxu0 0.0
        %651 = vmatpush1.xpose.msra.mxu0 0.0
        %652 = vmatprep.subr.mxu0 0.0
        %653 = vmatpush1.xpose.msra.mxu0 0.0
        %654 = vmatprep.subr.mxu0 0.0
        %655 = vmatpush1.xpose.msra.mxu0 0.0
        %656 = vmatprep.subr.mxu0 0.0
        %657 = vmatpush1.xpose.msra.mxu0 0.0
        %658 = vmatprep.subr.mxu0 0.0
        %659 = vmatpush1.xpose.msra.mxu0 0.0
        %660 = vmatprep.subr.mxu0 0.0
        %661 = vmatpush1.xpose.msra.mxu0 0.0
        %662 = vmatprep.subr.mxu0 0.0
        %663 = vmatpush1.xpose.msra.mxu0 0.0
        %664 = vmatprep.subr.mxu0 0.0
        %665 = vmatpush1.xpose.msra.mxu0 0.0
        %666 = vmatprep.subr.mxu0 0.0
        %667 = vmatpush1.xpose.msra.mxu0 0.0
        %668 = vmatprep.subr.mxu0 0.0
        %669 = vmatpush1.xpose.msra.mxu0 0.0
        %670 = vmatprep.subr.mxu0 0.0
        %671 = vmatpush1.xpose.msra.mxu0 0.0
        %672 = vmatprep.subr.mxu0 0.0
        %673 = vmatpush1.xpose.msra.mxu0 0.0
        %674 = vmatprep.subr.mxu0 0.0
        %675 = vmatpush1.xpose.msra.mxu0 0.0
        %676 = vmatprep.subr.mxu0 0.0
        %677 = vmatpush1.xpose.msra.mxu0 0.0
        %678 = vmatprep.subr.mxu0 0.0
        %679 = vmatpush1.xpose.msra.mxu0 0.0
        %680 = vmatprep.subr.mxu0 0.0
        %681 = vmatpush1.xpose.msra.mxu0 0.0
        %682 = vmatprep.subr.mxu0 0.0
        %683 = vmatpush1.xpose.msra.mxu0 0.0
        %684 = vmatprep.subr.mxu0 0.0
        %685 = vmatpush1.xpose.msra.mxu0 0.0
        %686 = vmatprep.mubr.f32.mxu0 0.0
        %687 = vmatmul.mubr.f32.gmra.mrb[0].mxu0 %v614
        %v688 = vpop.f32.mrb[0].mxu0
        %v689 = vadd.f32 0.0, %v688
        %v690 = vpop.f32.mrb[0].mxu0
        %691 = vdwg.mxu0
        %v693 = vsel %vm217, %v202, 0
        %v696 = vsel %vm217, %v215, 0
        %v699 = vsel %vm217, %v216, 0
        %701 = vmatprep.subr.mxu0 0.0
        %702 = vmatpush1.xpose.msra.mxu0 %v696
        %703 = vmatprep.subr.mxu0 0.0
        %704 = vmatpush1.xpose.msra.mxu0 %v699
        %705 = vmatprep.subr.mxu0 0.0
        %706 = vmatpush1.xpose.msra.mxu0 0.0
        %707 = vmatprep.subr.mxu0 0.0
        %708 = vmatpush1.xpose.msra.mxu0 0.0
        %709 = vmatprep.subr.mxu0 0.0
        %710 = vmatpush1.xpose.msra.mxu0 0.0
        %711 = vmatprep.subr.mxu0 0.0
        %712 = vmatpush1.xpose.msra.mxu0 0.0
        %713 = vmatprep.subr.mxu0 0.0
        %714 = vmatpush1.xpose.msra.mxu0 0.0
        %715 = vmatprep.subr.mxu0 0.0
        %716 = vmatpush1.xpose.msra.mxu0 0.0
        %717 = vmatprep.subr.mxu0 0.0
        %718 = vmatpush1.xpose.msra.mxu0 0.0
        %719 = vmatprep.subr.mxu0 0.0
        %720 = vmatpush1.xpose.msra.mxu0 0.0
        %721 = vmatprep.subr.mxu0 0.0
        %722 = vmatpush1.xpose.msra.mxu0 0.0
        %723 = vmatprep.subr.mxu0 0.0
        %724 = vmatpush1.xpose.msra.mxu0 0.0
        %725 = vmatprep.subr.mxu0 0.0
        %726 = vmatpush1.xpose.msra.mxu0 0.0
        %727 = vmatprep.subr.mxu0 0.0
        %728 = vmatpush1.xpose.msra.mxu0 0.0
        %729 = vmatprep.subr.mxu0 0.0
        %730 = vmatpush1.xpose.msra.mxu0 0.0
        %731 = vmatprep.subr.mxu0 0.0
        %732 = vmatpush1.xpose.msra.mxu0 0.0
        %733 = vmatprep.subr.mxu0 0.0
        %734 = vmatpush1.xpose.msra.mxu0 0.0
        %735 = vmatprep.subr.mxu0 0.0
        %736 = vmatpush1.xpose.msra.mxu0 0.0
        %737 = vmatprep.subr.mxu0 0.0
        %738 = vmatpush1.xpose.msra.mxu0 0.0
        %739 = vmatprep.subr.mxu0 0.0
        %740 = vmatpush1.xpose.msra.mxu0 0.0
        %741 = vmatprep.subr.mxu0 0.0
        %742 = vmatpush1.xpose.msra.mxu0 0.0
        %743 = vmatprep.subr.mxu0 0.0
        %744 = vmatpush1.xpose.msra.mxu0 0.0
        %745 = vmatprep.subr.mxu0 0.0
        %746 = vmatpush1.xpose.msra.mxu0 0.0
        %747 = vmatprep.subr.mxu0 0.0
        %748 = vmatpush1.xpose.msra.mxu0 0.0
        %749 = vmatprep.subr.mxu0 0.0
        %750 = vmatpush1.xpose.msra.mxu0 0.0
        %751 = vmatprep.subr.mxu0 0.0
        %752 = vmatpush1.xpose.msra.mxu0 0.0
        %753 = vmatprep.subr.mxu0 0.0
        %754 = vmatpush1.xpose.msra.mxu0 0.0
        %755 = vmatprep.subr.mxu0 0.0
        %756 = vmatpush1.xpose.msra.mxu0 0.0
        %757 = vmatprep.subr.mxu0 0.0
        %758 = vmatpush1.xpose.msra.mxu0 0.0
        %759 = vmatprep.subr.mxu0 0.0
        %760 = vmatpush1.xpose.msra.mxu0 0.0
        %761 = vmatprep.subr.mxu0 0.0
        %762 = vmatpush1.xpose.msra.mxu0 0.0
        %763 = vmatprep.subr.mxu0 0.0
        %764 = vmatpush1.xpose.msra.mxu0 0.0
        %765 = vmatprep.mubr.f32.mxu0 0.0
        %766 = vmatmul.mubr.f32.gmra.mrb[0].mxu0 %v693
        %v767 = vpop.f32.mrb[0].mxu0
        %v768 = vadd.f32 0.0, %v767
        %v769 = vpop.f32.mrb[0].mxu0
        %770 = vdwg.mxu0
        %vm771 = vcmask 72704
        %772 = vst.msk [vmem:[%s195] sm:$0xff] %vm771, %v294
        %773 = vst.msk [vmem:[%s195 + $0x8] sm:$0xff] %vm771, %v373
        %774 = vst.msk [vmem:[%s195 + $0x10] sm:$0xff] %vm771, %v452
        %775 = vst.msk [vmem:[%s195 + $0x18] sm:$0xff] %vm771, %v531
        %776 = vst.msk [vmem:[%s195 + $0x20] sm:$0xff] %vm771, %v610
        %777 = vst.msk [vmem:[%s195 + $0x28] sm:$0xff] %vm771, %v689
        %778 = vst.msk [vmem:[%s195 + $0x30] sm:$0xff] %vm771, %v768
        %s779 = sand.u32 %s68, 1
        %s780 = sand.u32 %s68, 1
        %s781 = smul.addr %s780, 56
        %s782 = scalar_lea.vmem [#allocation3], %s781
        // Predicated region
        $region67: #{emitter_forward.1} parent=61 // pred_check
          %p783 = pneg %p78
        $region68: #{emitter_forward.1} parent=61 // pred_check_branch
          %785 = sbr.rel (%p783) target = $region70
        $region69: #{emitter_forward.1} parent=61 // pred_region
          %s786 = smul.addr %s13, 8
          %s787 = scalar_lea.vmem %s2, %s786
          // Predicated region
          $region71: #{emitter_forward.1} parent=69 // pred_check
            _
          $region72: #{emitter_forward.1} parent=69 // pred_check_branch
            %789 = sbr.rel (0) target = $region74
          $region73: #{emitter_forward.1} parent=69 // pred_region
            // Predicated region
            $region75: #{emitter_forward.1} parent=73 // pred_check
              _
            $region76: #{emitter_forward.1} parent=73 // pred_check_branch
              %791 = sbr.rel (0) target = $region78
            $region77: #{emitter_forward.1} parent=73 // pred_region
              // Predicated region
              $region90: #{emitter_forward.1} parent=77 // pred_check
                _
              $region91: #{emitter_forward.1} parent=77 // pred_check_branch
                %818 = sbr.rel (0) target = $region93
              $region92: #{emitter_forward.1} parent=77 // pred_region
                loop: start=0, step=1, limit=1
                $region94: #{emitter_forward.1} parent=92 // loop_pre_header
                  _
                $region95: #{emitter_forward.1} parent=92 // loop_header
                  %s820 = sphi 0, %s824
                  %p821 = scmp.ge.s32.totalorder %s820, 1
                  %s825 = sphi %s782, %s782
                  %s826 = sphi %s787, %s787
                $region96: #{emitter_forward.1} parent=92 // loop_header_branch
                  %823 = sbr.rel (%p821) target = $region100
                $region97: #{emitter_forward.1} parent=92 // loop_body
                  %v827 = vld [vmem:[%s825] sm:$0xff]
                  %828 = vst [vmem:[%s826] sm:$0xff] %v827
                  %v829 = vld [vmem:[%s825 + $0x8] sm:$0xff]
                  %830 = vst [vmem:[%s826 + $0x18] sm:$0xff] %v829
                  %v831 = vld [vmem:[%s825 + $0x10] sm:$0xff]
                  %832 = vst [vmem:[%s826 + $0x30] sm:$0xff] %v831
                  %v833 = vld [vmem:[%s825 + $0x18] sm:$0xff]
                  %834 = vst [vmem:[%s826 + $0x48] sm:$0xff] %v833
                  %v835 = vld [vmem:[%s825 + $0x20] sm:$0xff]
                  %836 = vst [vmem:[%s826 + $0x60] sm:$0xff] %v835
                  %v837 = vld [vmem:[%s825 + $0x28] sm:$0xff]
                  %838 = vst [vmem:[%s826 + $0x78] sm:$0xff] %v837
                  %v839 = vld [vmem:[%s825 + $0x30] sm:$0xff]
                  %840 = vst [vmem:[%s826 + $0x90] sm:$0xff] %v839
                $region98: #{emitter_forward.1} parent=92 // loop_footer
                  %s824 = sadd.s32 1, %s820
                $region99: #{emitter_forward.1} parent=92 // loop_footer_branch
                  %819 = sbr.rel target = $region95
                $region100: #{emitter_forward.1} parent=92 // loop_exit
                  _
              $region93: #{emitter_forward.1} parent=77 // pred_fallthru
                _
              // Predicated region
              $region101: #{emitter_forward.1} parent=77 // pred_check
                _
              $region102: #{emitter_forward.1} parent=77 // pred_check_branch
                %842 = sbr.rel target = $region104
              $region103: #{emitter_forward.1} parent=77 // pred_region
                _
              $region104: #{emitter_forward.1} parent=77 // pred_fallthru
                _
            $region78: #{emitter_forward.1} parent=73 // pred_fallthru
              _
            // Predicated region
            $region79: #{emitter_forward.1} parent=73 // pred_check
              _
            $region80: #{emitter_forward.1} parent=73 // pred_check_branch
              %793 = sbr.rel target = $region82
            $region81: #{emitter_forward.1} parent=73 // pred_region
              loop: start=0, step=1, limit=1
              $region83: #{emitter_forward.1} parent=81 // loop_pre_header
                _
              $region84: #{emitter_forward.1} parent=81 // loop_header
                %s796 = sphi 0, %s800
                %p797 = scmp.ge.s32.totalorder %s796, 1
                %s801 = sphi %s782, %s782
                %s802 = sphi %s787, %s787
              $region85: #{emitter_forward.1} parent=81 // loop_header_branch
                %799 = sbr.rel (%p797) target = $region89
              $region86: #{emitter_forward.1} parent=81 // loop_body
                %v803 = vld [vmem:[%s801] sm:$0xff]
                %804 = vst [vmem:[%s802] sm:$0xff] %v803
                %v805 = vld [vmem:[%s801 + $0x8] sm:$0xff]
                %806 = vst [vmem:[%s802 + $0x18] sm:$0xff] %v805
                %v807 = vld [vmem:[%s801 + $0x10] sm:$0xff]
                %808 = vst [vmem:[%s802 + $0x30] sm:$0xff] %v807
                %v809 = vld [vmem:[%s801 + $0x18] sm:$0xff]
                %810 = vst [vmem:[%s802 + $0x48] sm:$0xff] %v809
                %v811 = vld [vmem:[%s801 + $0x20] sm:$0xff]
                %812 = vst [vmem:[%s802 + $0x60] sm:$0xff] %v811
                %v813 = vld [vmem:[%s801 + $0x28] sm:$0xff]
                %814 = vst [vmem:[%s802 + $0x78] sm:$0xff] %v813
                %v815 = vld [vmem:[%s801 + $0x30] sm:$0xff]
                %816 = vst [vmem:[%s802 + $0x90] sm:$0xff] %v815
              $region87: #{emitter_forward.1} parent=81 // loop_footer
                %s800 = sadd.s32 1, %s796
              $region88: #{emitter_forward.1} parent=81 // loop_footer_branch
                %795 = sbr.rel target = $region84
              $region89: #{emitter_forward.1} parent=81 // loop_exit
                _
            $region82: #{emitter_forward.1} parent=73 // pred_fallthru
              _
          $region74: #{emitter_forward.1} parent=69 // pred_fallthru
            _
          %843 = vnop
        $region70: #{emitter_forward.1} parent=61 // pred_fallthru
          _
      $region62: #{emitter_forward.1} parent=5 // pred_fallthru
        _
      %p844 = scmp.le.s32.totalorder 2, %s8
      // Predicated region
      $region105: #{emitter_forward.1} parent=5 // pred_check
        %p845 = pneg %p844
      $region106: #{emitter_forward.1} parent=5 // pred_check_branch
        %847 = sbr.rel (%p845) target = $region108
      $region107: #{emitter_forward.1} parent=5 // pred_region
        %s848 = ssub.s32 %s8, 2
        // Predicated region
        $region109: #{emitter_forward.1} parent=107 // pred_check
          %p849 = pneg %p84
        $region110: #{emitter_forward.1} parent=107 // pred_check_branch
          %851 = sbr.rel (%p849) target = $region112
        $region111: #{emitter_forward.1} parent=107 // pred_region
          %s852 = sand.u32 %s69, 1
          %s853 = sand.u32 %s69, 1
          %s854 = smul.addr %s853, 56
          %s855 = scalar_lea.vmem [#allocation3], %s854
        $region112: #{emitter_forward.1} parent=107 // pred_fallthru
          _
      $region108: #{emitter_forward.1} parent=5 // pred_fallthru
        _
    $region6: #{emitter_forward.1} parent=1 // loop_footer
      %s12 = sadd.s32 1, %s8
    $region7: #{emitter_forward.1} parent=1 // loop_footer_branch
      %7 = sbr.rel target = $region3
    $region8: #{emitter_forward.1} parent=1 // loop_exit
      _

</llo_original>
